<compile_context>
chip_gen: v7x
topology: tpu7x:2x2x1
jax: 0.10.0
libtpu: 0.0.40
codegen_flags: <defaults>
</compile_context>

<pallas_src>
import jax
import jax.numpy as jnp
from jax.experimental import pallas as pl
from jax.experimental.pallas import tpu as pltpu


def _round_up(x, m):
    return (x + m - 1) // m * m


def _cdiv(a, b):
    return -(-a // b)


def _make_kernel(num_seq_tiles, seq_rem):
    """Builds the kernel with static sequence-tiling facts baked in."""

    def kernel(x_ref, w_ref, b_ref, o_ref, pool_ref):
        # x_ref:    (TB, TL, D_in)  current batch/sequence tile
        # w_ref:    (D_in, D_out)   transposed once in the wrapper, VMEM-resident
        # b_ref:    (1, D_out)      VMEM-resident
        # o_ref:    (TB, D_out)
        # pool_ref: (TB, D_in)      running-max accumulator (VMEM scratch)
        l = pl.program_id(1)
        x = x_ref[...]

        if seq_rem:
            # Last sequence tile is ragged: positions >= seq_rem are
            # out-of-bounds garbage; mask them to -inf before the max.
            pos = jax.lax.broadcasted_iota(jnp.int32, x.shape, 1)
            keep = jnp.logical_or(l != num_seq_tiles - 1, pos < seq_rem)
            x = jnp.where(keep, x, -jnp.inf)

        # Reduce the sequence axis mostly with elementwise (VALU) maxima:
        # halve along 8-aligned sublane boundaries, then one small
        # cross-sublane reduce (keeps the XLU free for the norm reduction).
        while x.shape[1] % 16 == 0:
            h = x.shape[1] // 2
            x = jnp.maximum(x[:, :h], x[:, h:])
        tile_max = jnp.max(x, axis=1)                       # (TB, D_in)

        if num_seq_tiles == 1:
            m = tile_max
        else:
            @pl.when(l == 0)
            def _init():
                pool_ref[...] = jnp.full(pool_ref.shape, -jnp.inf,
                                         pool_ref.dtype)

            m = jnp.maximum(pool_ref[...], tile_max)

            # Finalize uses the in-register `m`; no store on the last step.
            @pl.when(l != num_seq_tiles - 1)
            def _carry():
                pool_ref[...] = m

        def _finalize():
            # Linear: (TB, D_in) @ (D_in, D_out) -- standard MXU form.
            out = jnp.dot(m, w_ref[...],
                          preferred_element_type=jnp.float32) + b_ref[...]
            # L2 row-normalize via rsqrt (EUP slot) instead of a divide.
            sumsq = jnp.sum(out * out, axis=1, keepdims=True)
            o_ref[...] = (out * jax.lax.rsqrt(sumsq)).astype(o_ref.dtype)

        if num_seq_tiles == 1:
            _finalize()
        else:
            pl.when(l == num_seq_tiles - 1)(_finalize)

    return kernel


def bow_encoder(in_data, lengths, weight, bias, *, max_seq_tile=None):
    """in_data: (B, L, D_in) f32; weight: (D_out, D_in) (PyTorch layout);
    bias: (D_out,).  Returns (B, D_out) f32 with L2-normalized rows."""
    # TODO(synk): `lengths` is unused by the reference forward pass (the max
    # includes padded positions); masking with lengths would change semantics.
    del lengths
    B, L, D_in = in_data.shape
    D_out = weight.shape[0]

    # --- tile sizes ---------------------------------------------------------
    # Batch tile: multiple of 8 (output-block constraint) unless it covers the
    # whole batch; keep >= 2 batch tiles whenever B > 8 so the "parallel" grid
    # axis can be sharded across both TensorCores on v7x.
    if B <= 8:
        TB = B
    else:
        TB = min(128, max(8, _round_up(_cdiv(B, 2), 8)))

    # Sequence tile: budget-driven so the x double-buffer stays well inside
    # VMEM on every generation (v7x: 64 MiB physical).  Prefer TL == L; else
    # the largest multiple of 8 dividing L; else the cap + in-kernel mask.
    X_TILE_BUDGET = 12 << 20                               # per pipeline buffer
    tl_cap = max(8, (X_TILE_BUDGET // (TB * D_in * 4)) // 8 * 8)
    if max_seq_tile is not None:
        tl_cap = max(8, min(tl_cap, max_seq_tile // 8 * 8))

    if L <= tl_cap:
        TL = L
    else:
        TL = 0
        t = tl_cap
        while t >= 8:
            if L % t == 0:
                TL = t
                break
            t -= 8
        if TL == 0:
            TL = tl_cap
    num_seq_tiles = _cdiv(L, TL)
    seq_rem = L % TL if num_seq_tiles > 1 else 0

    grid = (_cdiv(B, TB), num_seq_tiles)

    # One-time (wrapper-side) transpose: the in-kernel matmul contracts on a
    # leading-RHS dim, so Mosaic never re-transposes the weight per batch tile.
    w_t = weight.T                                         # (D_in, D_out)
    b2 = bias.reshape(1, D_out)

    # Scoped-VMEM request: working set + headroom, capped so it also fits
    # v7x's 64 MiB physical VMEM and lifts v5e's 16 MiB default when needed.
    work = (2 * TB * TL * D_in * 4                         # x double-buffer
            + 2 * (D_in * D_out + D_out) * 4               # weight + bias
            + 2 * TB * D_out * 4                           # output double-buffer
            + TB * D_in * 4)                               # pool scratch
    vmem_limit = int(min(48 << 20, max(work + (2 << 20), 16 << 20)))

    kernel = _make_kernel(num_seq_tiles, seq_rem)

    out = pl.pallas_call(
        kernel,
        out_shape=jax.ShapeDtypeStruct((B, D_out), jnp.float32),
        grid_spec=pltpu.PrefetchScalarGridSpec(
            num_scalar_prefetch=0,
            grid=grid,
            in_specs=[
                pl.BlockSpec((TB, TL, D_in), lambda i, l: (i, l, 0)),
                pl.BlockSpec((D_in, D_out), lambda i, l: (0, 0)),   # resident
                pl.BlockSpec((1, D_out), lambda i, l: (0, 0)),      # resident
            ],
            out_specs=pl.BlockSpec((TB, D_out), lambda i, l: (i, 0)),
            scratch_shapes=[pltpu.VMEM((TB, D_in), jnp.float32)],
        ),
        compiler_params=pltpu.CompilerParams(
            dimension_semantics=("parallel", "arbitrary"),
            vmem_limit_bytes=vmem_limit),
    )(in_data, w_t, b2)

    return out


def _reference(in_data, weight, bias):
    pool = jnp.max(in_data, axis=1)
    out = pool @ weight.T + bias
    return out / jnp.linalg.norm(out, axis=1, keepdims=True)


if __name__ == "__main__":
    key = jax.random.PRNGKey(0)

    def run_case(B, L, D_in, D_out, case_key, max_seq_tile=None):
        k_x, k_w, k_b = jax.random.split(case_key, 3)
        in_data = jax.random.normal(k_x, (B, L, D_in), dtype=jnp.float32)
        lengths = jnp.full((B,), L, dtype=jnp.int32)
        # Deterministic Linear(input_size, output_size) params (PyTorch (out, in) layout).
        weight = (jax.random.uniform(k_w, (D_out, D_in), dtype=jnp.float32) - 0.5) * 0.2
        bias = (jax.random.uniform(k_b, (D_out,), dtype=jnp.float32) - 0.5) * 0.2

        out = jax.block_until_ready(
            bow_encoder(in_data, lengths, weight, bias, max_seq_tile=max_seq_tile))
        ref = _reference(in_data, weight, bias)
        assert out.shape == (B, D_out), (out.shape, B, D_out)
        err = float(jnp.max(jnp.abs(out - ref)))
        assert err < 2e-5, (B, L, D_in, D_out, err)

    k1, k2, k3, k4, k5 = jax.random.split(key, 5)
    run_case(8, 8, 128, 128, k1)                     # single tile in both grid axes
    run_case(13, 10, 128, 128, k2)                   # ragged batch edge (2 batch tiles, no pad)
    run_case(8, 160, 128, 128, k3, max_seq_tile=64)  # multi seq tiles, TL=40 divides L (no mask)
    run_case(8, 150, 128, 128, k4, max_seq_tile=64)  # ragged last seq tile -> in-kernel -inf mask
    run_case(4, 12, 96, 64, k5)                      # non-128 feature dims (full-dim blocks)

    print("KERNEL_OK")
</pallas_src>

<mosaic_0001>
module attributes {stable_mosaic.version = 11 : i64} {
  func.func @kernel(%arg0: i32, %arg1: i32, %arg2: memref<8x8x128xf32, #tpu.memory_space<vmem>>, %arg3: memref<128x128xf32, #tpu.memory_space<vmem>>, %arg4: memref<1x128xf32, #tpu.memory_space<vmem>>, %arg5: memref<8x128xf32, #tpu.memory_space<vmem>>, %arg6: memref<8x128xf32, #tpu.memory_space<vmem>>) attributes {dimension_semantics = [#tpu.dimension_semantics<parallel>, #tpu.dimension_semantics<arbitrary>], iteration_bounds = array<i64: 1, 1>, scalar_prefetch = 0 : i64, scratch_operands = 1 : i64, tpu.core_type = #tpu.core_type<tc>, window_params = [{transform_indices = @transform_0, window_bounds = array<i64: 8, 8, 128>}, {pipeline_mode = #tpu.pipeline_mode<synchronous>, transform_indices = @transform_1, window_bounds = array<i64: 128, 128>}, {pipeline_mode = #tpu.pipeline_mode<synchronous>, transform_indices = @transform_2, window_bounds = array<i64: 1, 128>}, {transform_indices = @transform_3, window_bounds = array<i64: 8, 128>}]} {
    %c0 = arith.constant 0 : index
    %c0_0 = arith.constant 0 : index
    %c0_1 = arith.constant 0 : index
    %0 = vector.load %arg2[%c0, %c0_0, %c0_1] : memref<8x8x128xf32, #tpu.memory_space<vmem>>, vector<8x8x128xf32>
    %cst = arith.constant dense<0xFF800000> : vector<8x128xf32>
    %1 = vector.multi_reduction <maximumf>, %0, %cst [1] : vector<8x8x128xf32> to vector<8x128xf32>
    %c0_2 = arith.constant 0 : index
    %c0_3 = arith.constant 0 : index
    %2 = vector.load %arg3[%c0_2, %c0_3] : memref<128x128xf32, #tpu.memory_space<vmem>>, vector<128x128xf32>
    %cst_4 = arith.constant dense<0.000000e+00> : vector<8x128xf32>
    %3 = tpu.matmul %1, %2, %cst_4 {dimension_numbers = #tpu.dot_dimension_numbers<[1], [0], [0], [1], [0, 0, 1, 1], [], []>} : vector<8x128xf32>, vector<128x128xf32>, vector<8x128xf32> -> vector<8x128xf32>
    %c0_5 = arith.constant 0 : index
    %c0_6 = arith.constant 0 : index
    %4 = vector.load %arg4[%c0_5, %c0_6] : memref<1x128xf32, #tpu.memory_space<vmem>>, vector<1x128xf32>
    %5 = vector.broadcast %4 : vector<1x128xf32> to vector<8x128xf32>
    %6 = arith.addf %3, %5 : vector<8x128xf32>
    %7 = arith.mulf %6, %6 : vector<8x128xf32>
    %cst_7 = arith.constant dense<0.000000e+00> : vector<8xf32>
    %8 = vector.multi_reduction <add>, %7, %cst_7 [1] : vector<8x128xf32> to vector<8xf32>
    %9 = vector.shape_cast %8 : vector<8xf32> to vector<8x1xf32>
    %10 = math.rsqrt %9 : vector<8x1xf32>
    %11 = vector.broadcast %10 : vector<8x1xf32> to vector<8x128xf32>
    %12 = arith.mulf %6, %11 : vector<8x128xf32>
    %c0_8 = arith.constant 0 : index
    %c0_9 = arith.constant 0 : index
    %13 = vector.load %arg5[%c0_8, %c0_9] : memref<8x128xf32, #tpu.memory_space<vmem>>, vector<8x128xf32>
    tpu.vector_store %arg5[%c0_8, %c0_9], %12 {strides = array<i32>} : memref<8x128xf32, #tpu.memory_space<vmem>>, vector<8x128xf32>,
    return
  }
  func.func @transform_0(%arg0: i32, %arg1: i32) -> (i32, i32, i32) {
    %c0_i32 = arith.constant 0 : i32
    %c0_i32_0 = arith.constant 0 : i32
    return %arg0, %arg1, %c0_i32 : i32, i32, i32
  }
  func.func @transform_1(%arg0: i32, %arg1: i32) -> (i32, i32) {
    %c0_i32 = arith.constant 0 : i32
    %c0_i32_0 = arith.constant 0 : i32
    %c0_i32_1 = arith.constant 0 : i32
    return %c0_i32, %c0_i32_0 : i32, i32
  }
  func.func @transform_2(%arg0: i32, %arg1: i32) -> (i32, i32) {
    %c0_i32 = arith.constant 0 : i32
    %c0_i32_0 = arith.constant 0 : i32
    %c0_i32_1 = arith.constant 0 : i32
    return %c0_i32, %c0_i32_0 : i32, i32
  }
  func.func @transform_3(%arg0: i32, %arg1: i32) -> (i32, i32) {
    %c0_i32 = arith.constant 0 : i32
    %c0_i32_0 = arith.constant 0 : i32
    return %arg0, %c0_i32 : i32, i32
  }
}

</mosaic_0001>

<llo_original>
// kernel: tpu_custom_call.1
$region0: #{tpu_custom_call.1}
  #allocation0 [shape = 'u32[]', space=smem, size = 0x4, offset = 0x4, fixed_abs, tag = 'smem constant byte address 0x4 - core index']
  #allocation1 [shape = 'u32[144,128]{1,0:T(1,128)}', space=vmem, size = 0x12000, scoped, tag = 'internal scratch']
  #allocation2 [shape = 'f32[8,128]{1,0:T(8,128)}', space=vmem, size = 0x1000, scoped, tag = 'scratch operand']
  %s0 = inlined_call_operand.hbm [shape: f32[8,8,128], index: 0, kind: input, shape index: {}]
  %s1 = inlined_call_operand.hbm [shape: f32[128,128], index: 1, kind: input, shape index: {}]
  %s2 = inlined_call_operand.vmem [shape: f32[1,128], index: 2, kind: input, shape index: {}]
  %s3 = inlined_call_operand.hbm [shape: f32[8,128], index: 3, kind: output, shape index: {}]
  %s4 = sld [smem:[#allocation0]]
  $region30: #{tpu_custom_call.1} parent=0
    _
  %s6 = ssub.s32 1, %s4
  %s7 = scalar_select 0, %s6, %s4
  $region1: #{tpu_custom_call.1} parent=0
    #allocation3 [shape = 'u8[32768]{0}', space=vmem, size = 0x8000, scoped, tag = 'input window, operand 0, single buffered']
    #allocation4 [shape = 's32[1]{0}', space=sflag, size = 0x4, scoped, tag = 'scoped memory for tpu_custom_call.1']
    #allocation5 [shape = 's32[1]{0}', space=sflag, size = 0x4, scoped, tag = 'scoped memory for tpu_custom_call.1']
    #allocation6 [shape = 'u8[65536]{0}', space=vmem, size = 0x10000, scoped, tag = 'input window, operand 1, single buffered']
    #allocation7 [shape = 's32[1]{0}', space=sflag, size = 0x4, scoped, tag = 'scoped memory for tpu_custom_call.1']
    #allocation8 [shape = 'u8[4096]{0}', space=vmem, size = 0x1000, scoped, tag = 'output window, operand 0, single buffered']
    %8 = vsyncpa [#allocation4], 0
    %9 = vsyncpa [#allocation7], 0
    %10 = vsyncpa [#allocation5], 0
    // Predicated region
    $region2: #{tpu_custom_call.1} parent=1 // pred_check
      _
    $region3: #{tpu_custom_call.1} parent=1 // pred_check_branch
      %12 = sbr.rel (0) target = $region5
    $region4: #{tpu_custom_call.1} parent=1 // pred_region
      %s14 = ssub.s32 1024, 1024
      %15 = vsyncadd [#allocation4], %s14
      %s16 = sshll.u32 [#allocation3], 4
      %s17 = int_to_ptr.vmem [resolvable:$true] %s16
      %22 = dma.hbm_to_vmem [thread:$0]  %s0, 1024, %s17, [#allocation4], 128, 128, 8
    $region5: #{tpu_custom_call.1} parent=1 // pred_fallthru
      _
    // Predicated region
    $region6: #{tpu_custom_call.1} parent=1 // pred_check
      _
    $region7: #{tpu_custom_call.1} parent=1 // pred_check_branch
      %24 = sbr.rel (0) target = $region9
    $region8: #{tpu_custom_call.1} parent=1 // pred_region
      %s26 = ssub.s32 2048, 2048
      %27 = vsyncadd [#allocation7], %s26
      %s28 = sshll.u32 [#allocation6], 4
      %s29 = int_to_ptr.vmem [resolvable:$true] %s28
      %34 = dma.hbm_to_vmem [thread:$0]  %s1, 2048, %s29, [#allocation7], 128, 128, 8
    $region9: #{tpu_custom_call.1} parent=1 // pred_fallthru
      _
    // Predicated region
    $region10: #{tpu_custom_call.1} parent=1 // pred_check
      _
    $region11: #{tpu_custom_call.1} parent=1 // pred_check_branch
      %36 = sbr.rel (0) target = $region13
    $region12: #{tpu_custom_call.1} parent=1 // pred_region
      _
    $region13: #{tpu_custom_call.1} parent=1 // pred_fallthru
      _
    // Predicated region
    $region14: #{tpu_custom_call.1} parent=1 // pred_check
      _
    $region15: #{tpu_custom_call.1} parent=1 // pred_check_branch
      %38 = sbr.rel (0) target = $region17
    $region16: #{tpu_custom_call.1} parent=1 // pred_region
      %39 = dma.done [#allocation4], 1024
    $region17: #{tpu_custom_call.1} parent=1 // pred_fallthru
      _
    // Predicated region
    $region18: #{tpu_custom_call.1} parent=1 // pred_check
      _
    $region19: #{tpu_custom_call.1} parent=1 // pred_check_branch
      %41 = sbr.rel (0) target = $region21
    $region20: #{tpu_custom_call.1} parent=1 // pred_region
      %42 = dma.done [#allocation7], 2048
    $region21: #{tpu_custom_call.1} parent=1 // pred_fallthru
      _
    %v43 = vld [vmem:[#allocation3] sm:$0xff]
    %v44 = vld [vmem:[#allocation3 + $0x8] sm:$0xff]
    %v45 = vld [vmem:[#allocation3 + $0x10] sm:$0xff]
    %v46 = vld [vmem:[#allocation3 + $0x18] sm:$0xff]
    %v47 = vld [vmem:[#allocation3 + $0x20] sm:$0xff]
    %v48 = vld [vmem:[#allocation3 + $0x28] sm:$0xff]
    %v49 = vld [vmem:[#allocation3 + $0x30] sm:$0xff]
    %v50 = vld [vmem:[#allocation3 + $0x38] sm:$0xff]
    %v51 = vrot.slane %v43, 4
    %v52 = vmax.f32 %v43, %v51
    %v53 = vrot.slane %v52, 2
    %v54 = vmax.f32 %v52, %v53
    %v55 = vrot.slane %v54, 1
    %v56 = vmax.f32 %v54, %v55
    %v57 = vrot.slane %v44, 4
    %v58 = vmax.f32 %v44, %v57
    %v59 = vrot.slane %v58, 2
    %v60 = vmax.f32 %v58, %v59
    %v61 = vrot.slane %v60, 1
    %v62 = vmax.f32 %v60, %v61
    %v63 = vrot.slane %v45, 4
    %v64 = vmax.f32 %v45, %v63
    %v65 = vrot.slane %v64, 2
    %v66 = vmax.f32 %v64, %v65
    %v67 = vrot.slane %v66, 1
    %v68 = vmax.f32 %v66, %v67
    %v69 = vrot.slane %v46, 4
    %v70 = vmax.f32 %v46, %v69
    %v71 = vrot.slane %v70, 2
    %v72 = vmax.f32 %v70, %v71
    %v73 = vrot.slane %v72, 1
    %v74 = vmax.f32 %v72, %v73
    %v75 = vrot.slane %v47, 4
    %v76 = vmax.f32 %v47, %v75
    %v77 = vrot.slane %v76, 2
    %v78 = vmax.f32 %v76, %v77
    %v79 = vrot.slane %v78, 1
    %v80 = vmax.f32 %v78, %v79
    %v81 = vrot.slane %v48, 4
    %v82 = vmax.f32 %v48, %v81
    %v83 = vrot.slane %v82, 2
    %v84 = vmax.f32 %v82, %v83
    %v85 = vrot.slane %v84, 1
    %v86 = vmax.f32 %v84, %v85
    %v87 = vrot.slane %v49, 4
    %v88 = vmax.f32 %v49, %v87
    %v89 = vrot.slane %v88, 2
    %v90 = vmax.f32 %v88, %v89
    %v91 = vrot.slane %v90, 1
    %v92 = vmax.f32 %v90, %v91
    %v93 = vrot.slane %v50, 4
    %v94 = vmax.f32 %v50, %v93
    %v95 = vrot.slane %v94, 2
    %v96 = vmax.f32 %v94, %v95
    %v97 = vrot.slane %v96, 1
    %v98 = vmax.f32 %v96, %v97
    %v99 = vld [vmem:[#allocation6] sm:$0xff]
    %v100 = vld [vmem:[#allocation6 + $0x8] sm:$0xff]
    %v101 = vld [vmem:[#allocation6 + $0x10] sm:$0xff]
    %v102 = vld [vmem:[#allocation6 + $0x18] sm:$0xff]
    %v103 = vld [vmem:[#allocation6 + $0x20] sm:$0xff]
    %v104 = vld [vmem:[#allocation6 + $0x28] sm:$0xff]
    %v105 = vld [vmem:[#allocation6 + $0x30] sm:$0xff]
    %v106 = vld [vmem:[#allocation6 + $0x38] sm:$0xff]
    %v107 = vld [vmem:[#allocation6 + $0x40] sm:$0xff]
    %v108 = vld [vmem:[#allocation6 + $0x48] sm:$0xff]
    %v109 = vld [vmem:[#allocation6 + $0x50] sm:$0xff]
    %v110 = vld [vmem:[#allocation6 + $0x58] sm:$0xff]
    %v111 = vld [vmem:[#allocation6 + $0x60] sm:$0xff]
    %v112 = vld [vmem:[#allocation6 + $0x68] sm:$0xff]
    %v113 = vld [vmem:[#allocation6 + $0x70] sm:$0xff]
    %v114 = vld [vmem:[#allocation6 + $0x78] sm:$0xff]
    %v115 = vld [vmem:[%s2] sm:$0x1]
    %v117 = vlaneseq
    %v118 = vshrl.u32 %v117, 7
    %v119 = vsub.s32 0, %v118
    %v120 = vrot.slane %v115, %v119
    %vm130 = vcmask 1041409
    %v131 = vsel %vm130, %v62, %v56
    %vm132 = vcmask 1042434
    %v133 = vsel %vm132, %v68, %v131
    %vm134 = vcmask 1043459
    %v135 = vsel %vm134, %v74, %v133
    %vm136 = vcmask 1044484
    %v137 = vsel %vm136, %v80, %v135
    %vm138 = vcmask 1045509
    %v139 = vsel %vm138, %v86, %v137
    %vm140 = vcmask 1046534
    %v141 = vsel %vm140, %v92, %v139
    %vm142 = vcmask 1047559
    %v143 = vsel %vm142, %v98, %v141
    %145 = vmatprep.subr.mxu0 0.0
    %146 = vmatpush1.msra.mxu0 %v99
    %147 = vmatprep.subr.mxu0 0.0
    %148 = vmatpush1.msra.mxu0 %v100
    %149 = vmatprep.subr.mxu0 0.0
    %150 = vmatpush1.msra.mxu0 %v101
    %151 = vmatprep.subr.mxu0 0.0
    %152 = vmatpush1.msra.mxu0 %v102
    %153 = vmatprep.subr.mxu0 0.0
    %154 = vmatpush1.msra.mxu0 %v103
    %155 = vmatprep.subr.mxu0 0.0
    %156 = vmatpush1.msra.mxu0 %v104
    %157 = vmatprep.subr.mxu0 0.0
    %158 = vmatpush1.msra.mxu0 %v105
    %159 = vmatprep.subr.mxu0 0.0
    %160 = vmatpush1.msra.mxu0 %v106
    %161 = vmatprep.subr.mxu0 0.0
    %162 = vmatpush1.msra.mxu0 %v107
    %163 = vmatprep.subr.mxu0 0.0
    %164 = vmatpush1.msra.mxu0 %v108
    %165 = vmatprep.subr.mxu0 0.0
    %166 = vmatpush1.msra.mxu0 %v109
    %167 = vmatprep.subr.mxu0 0.0
    %168 = vmatpush1.msra.mxu0 %v110
    %169 = vmatprep.subr.mxu0 0.0
    %170 = vmatpush1.msra.mxu0 %v111
    %171 = vmatprep.subr.mxu0 0.0
    %172 = vmatpush1.msra.mxu0 %v112
    %173 = vmatprep.subr.mxu0 0.0
    %174 = vmatpush1.msra.mxu0 %v113
    %175 = vmatprep.subr.mxu0 0.0
    %176 = vmatpush1.msra.mxu0 %v114
    %177 = vmatprep.subr.mxu0 0.0
    %178 = vmatpush1.msra.mxu0 0.0
    %179 = vmatprep.subr.mxu0 0.0
    %180 = vmatpush1.msra.mxu0 0.0
    %181 = vmatprep.subr.mxu0 0.0
    %182 = vmatpush1.msra.mxu0 0.0
    %183 = vmatprep.subr.mxu0 0.0
    %184 = vmatpush1.msra.mxu0 0.0
    %185 = vmatprep.subr.mxu0 0.0
    %186 = vmatpush1.msra.mxu0 0.0
    %187 = vmatprep.subr.mxu0 0.0
    %188 = vmatpush1.msra.mxu0 0.0
    %189 = vmatprep.subr.mxu0 0.0
    %190 = vmatpush1.msra.mxu0 0.0
    %191 = vmatprep.subr.mxu0 0.0
    %192 = vmatpush1.msra.mxu0 0.0
    %193 = vmatprep.subr.mxu0 0.0
    %194 = vmatpush1.msra.mxu0 0.0
    %195 = vmatprep.subr.mxu0 0.0
    %196 = vmatpush1.msra.mxu0 0.0
    %197 = vmatprep.subr.mxu0 0.0
    %198 = vmatpush1.msra.mxu0 0.0
    %199 = vmatprep.subr.mxu0 0.0
    %200 = vmatpush1.msra.mxu0 0.0
    %201 = vmatprep.subr.mxu0 0.0
    %202 = vmatpush1.msra.mxu0 0.0
    %203 = vmatprep.subr.mxu0 0.0
    %204 = vmatpush1.msra.mxu0 0.0
    %205 = vmatprep.subr.mxu0 0.0
    %206 = vmatpush1.msra.mxu0 0.0
    %207 = vmatprep.subr.mxu0 0.0
    %208 = vmatpush1.msra.mxu0 0.0
    %209 = vmatprep.mubr.f32.mxu0 0.0
    %210 = vmatmul.mubr.f32.gmra.mrb[0].mxu0 %v143
    %v211 = vpop.f32.mrb[0].mxu0
    %v212 = vadd.f32 %v120, %v211
    %v213 = vpop.f32.mrb[0].mxu0
    %214 = vdwg.mxu0
    %v215 = vmul.f32 %v212, %v212
    %216 = vadd.xlane.f32.xlu0 %v215
    %v217 = vpop.xlane.xlu0 %216
    %v218 = vrsqrt.pop %v217
    %v219 = vmul.f32 %v212, %v218
    %220 = vst [vmem:[#allocation8] sm:$0xff] %v219
    // Predicated region
    $region22: #{tpu_custom_call.1} parent=1 // pred_check
      _
    $region23: #{tpu_custom_call.1} parent=1 // pred_check_branch
      %222 = sbr.rel (0) target = $region25
    $region24: #{tpu_custom_call.1} parent=1 // pred_region
      %s224 = ssub.s32 128, 128
      %225 = vsyncadd [#allocation5], %s224
      %s227 = sshll.u32 [#allocation8], 4
      %s228 = int_to_ptr.vmem [resolvable:$true] %s227
      %230 = dma.vmem_to_hbm [thread:$0]  %s228, 128, %s3, [#allocation5]
    $region25: #{tpu_custom_call.1} parent=1 // pred_fallthru
      _
    // Predicated region
    $region26: #{tpu_custom_call.1} parent=1 // pred_check
      _
    $region27: #{tpu_custom_call.1} parent=1 // pred_check_branch
      %232 = sbr.rel (0) target = $region29
    $region28: #{tpu_custom_call.1} parent=1 // pred_region
      %233 = dma.done [#allocation5], 128
    $region29: #{tpu_custom_call.1} parent=1 // pred_fallthru
      _
    %234 = vsyncpa [#allocation4], 1
    %235 = vsyncpa [#allocation7], 1
    %236 = vsyncpa [#allocation5], 1

</llo_original>
